<compile_context>
chip_gen: v7x
topology: tpu7x:2x2x1
jax: 0.10.0
libtpu: 0.0.40
codegen_flags: <defaults>
</compile_context>

<pallas_src>
import functools

import jax
import jax.numpy as jnp
from jax.experimental import pallas as pl
from jax.experimental.pallas import tpu as pltpu


def _round_up(x: int, m: int) -> int:
    return ((x + m - 1) // m) * m


def _cdiv(a: int, b: int) -> int:
    return (a + b - 1) // b


def _pick_tb(batch: int, max_tb: int) -> int:
    """Batch tile: multiple of 8 (f32 sublane) capped at max_tb, or the full batch
    when it is tiny. Prefers >= 2 batch grid steps so v7x's two TensorCores work."""
    if batch <= 8:
        return batch
    tb = min(_round_up(max_tb, 8), _round_up(batch, 8))
    while tb > 8 and _cdiv(batch, tb) < 2:
        tb -= 8
    return tb


def _vmem_capacity_bytes() -> int:
    try:
        return int(pltpu.get_tpu_info().vmem_capacity_bytes)
    except Exception:
        return 64 * 1024 * 1024        # conservative (v7x per-core VMEM)


def bahdanau_kernel(hb_ref, enc_ref, we_ref, v_ref, out_ref, *,
                    seq_len: int, n_chunks: int):
    s_idx = pl.program_id(1)
    tb, ts, e2 = enc_ref.shape
    d_pad = we_ref.shape[1]

    # Encoder projection for this (batch tile, step chunk). The f32 tile is
    # flattened over its tile-aligned leading dims (free re-view, ts % 8 == 0) and
    # cast to bf16 on the fly; the MXU accumulates in f32.
    enc2d = enc_ref[...].reshape(tb * ts, e2).astype(jnp.bfloat16)
    eproj = jnp.dot(enc2d, we_ref[...], preferred_element_type=jnp.float32)
    eproj = eproj.reshape(tb, ts, d_pad)                       # (tb, ts, d_pad) f32

    # energy = tanh(enc@We + (hidden@Wh + b)); the hidden projection + bias arrives
    # precomputed from the wrapper. Elementwise math stays f32 (v5e-safe).
    # TODO(synk): on v6e/v7x the tanh and the v-dot could run in bf16 (keep the
    # softmax max/exp/sum in f32); keep f32 everywhere on v5e.
    energy = jnp.tanh(eproj + hb_ref[...][:, None, :])
    scores = jnp.sum(energy * v_ref[...][None, :, :], axis=-1)  # (tb, ts) f32

    # Stage this chunk's scores into the grid-resident output block.
    if n_chunks == 1:
        out_ref[:, 0:ts] = scores                               # static slice
    else:
        start = pl.multiple_of(s_idx * ts, 128)                 # ts % 128 == 0 here
        out_ref[:, pl.ds(start, ts)] = scores

    # Last chunk: mask padded steps, softmax over all steps, one lane-dense store.
    @pl.when(s_idx == n_chunks - 1)
    def _():
        sc = out_ref[...]                                       # (tb, s_out)
        step = jax.lax.broadcasted_iota(jnp.int32, sc.shape, 1)
        sc = jnp.where(step < seq_len, sc, -jnp.inf)
        m = jnp.max(sc, axis=-1, keepdims=True)
        e = jnp.exp(sc - m)
        denom = jnp.sum(e, axis=-1, keepdims=True)
        out_ref[...] = e * pl.reciprocal(denom, approx=True)


def bahdanau_attention(hidden, enc_output, w_fc, b_fc, v,
                       *, block_b: int = 32, s_chunk: int = 512):
    """hidden: (B, D) f32; enc_output: (B, S, 2*E) f32; w_fc: (D + 2*E, D) in x@W
    layout; b_fc: (D,); v: (D,). Returns (B, S) softmax attention weights (f32)."""
    B, D = hidden.shape
    Be, S, E2 = enc_output.shape
    assert Be == B and w_fc.shape == (D + E2, D)
    assert b_fc.shape == (D,) and v.shape == (D,)

    d_pad = _round_up(D, 128)          # lane-dense projection width

    # Split the concatenated Linear; hoist the tiny hidden projection (+ bias) to
    # XLA so the kernel only ever touches one MXU weight matrix (We).
    wh = w_fc[:D, :]
    we = w_fc[D:, :]
    hb = jnp.dot(hidden, wh, precision="highest") + b_fc[None, :]      # (B, D) f32
    if d_pad != D:                     # zero columns contribute exactly 0 to scores
        hb = jnp.pad(hb, ((0, 0), (0, d_pad - D)))
        we = jnp.pad(we, ((0, 0), (0, d_pad - D)))
        v = jnp.pad(v, (0, d_pad - D))
    hb = hb.astype(jnp.float32)
    we_b = we.astype(jnp.bfloat16)                                      # (E2, d_pad)
    v2d = v.reshape(1, d_pad).astype(jnp.float32)

    # enc stays f32 / 3-D in HBM; only an at-most-7-row pad of S to the f32 sublane
    # multiple so the in-kernel (tb, ts, E2) -> (tb*ts, E2) flatten is layout-free.
    s8 = _round_up(S, 8)
    enc = enc_output if s8 == S else jnp.pad(enc_output, ((0, 0), (0, s8 - S), (0, 0)))

    # ---- tile planning -------------------------------------------------------
    tb = _pick_tb(B, block_b)
    s_chunk = max(128, (s_chunk // 128) * 128)       # lane-aligned step chunks
    ts = s8 if s8 <= s_chunk else s_chunk

    vmem_cap = (3 * _vmem_capacity_bytes()) // 4     # ~48 MiB v7x, ~96 MiB v5e/v6e

    def plan(tb_, ts_):
        n_ = _cdiv(s8, ts_)
        s_out_ = _round_up(n_ * ts_, 128)            # lane-dense output block
        need_ = (2 * (tb_ * ts_ * E2 * 4             # enc block (f32, double-buffered)
                      + tb_ * d_pad * 4              # hidden-proj block
                      + tb_ * s_out_ * 4)            # output block
                 + E2 * d_pad * 2 + d_pad * 4        # We + v (single-buffered)
                 + tb_ * ts_ * E2 * 2                # in-kernel bf16 enc copy
                 + 2 * tb_ * ts_ * d_pad * 4         # eproj / energy (f32)
                 + tb_ * ts_ * 4)                    # chunk scores
        return n_, s_out_, need_

    n_chunks, s_out, need = plan(tb, ts)
    while need + need // 4 > vmem_cap and ts > 128 and s8 > 128:   # shrink chunk first
        ts = max(128, ((ts // 2) // 128) * 128)
        n_chunks, s_out, need = plan(tb, ts)
    while need + need // 4 > vmem_cap and tb > 8:                  # then the batch tile
        tb = max(8, ((tb // 2) // 8) * 8)
        n_chunks, s_out, need = plan(tb, ts)
    assert n_chunks == 1 or ts % 128 == 0

    vmem_limit = int(min(vmem_cap, max(need + need // 2, 8 * 1024 * 1024)))
    grid = (_cdiv(B, tb), n_chunks)
    kernel = functools.partial(bahdanau_kernel, seq_len=S, n_chunks=n_chunks)

    cost = pl.CostEstimate(
        flops=2 * B * S * E2 * d_pad + 6 * B * S * d_pad + 4 * B * s_out,
        transcendentals=B * S * d_pad + B * s_out,
        bytes_accessed=(B * s8 * E2 * 4 + B * d_pad * 4 + E2 * d_pad * 2
                        + d_pad * 4 + B * s_out * 4),
    )

    def run(single_buffer_weights: bool):
        def resident(shape):
            if single_buffer_weights:
                return pl.BlockSpec(shape, lambda i, s: (0, 0),
                                    pipeline_mode=pl.Buffered(1))
            return pl.BlockSpec(shape, lambda i, s: (0, 0))

        return pl.pallas_call(
            kernel,
            out_shape=jax.ShapeDtypeStruct((B, s_out), jnp.float32),
            grid=grid,
            in_specs=[
                pl.BlockSpec((tb, d_pad), lambda i, s: (i, 0)),       # hidden@Wh + b
                pl.BlockSpec((tb, ts, E2), lambda i, s: (i, s, 0)),   # enc chunk (f32)
                resident((E2, d_pad)),                                # We (bf16)
                resident((1, d_pad)),                                 # v
            ],
            out_specs=pl.BlockSpec((tb, s_out), lambda i, s: (i, 0)),
            compiler_params=pltpu.CompilerParams(
                dimension_semantics=("parallel", "arbitrary"),
                vmem_limit_bytes=vmem_limit,
            ),
            cost_estimate=cost,
        )(hb, enc, we_b, v2d)

    try:
        out_pad = run(True)      # invariant operands single-buffered
    except Exception:
        out_pad = run(False)     # fallback if Buffered(1)/pipeline_mode unsupported

    return out_pad[:, :S]


def bahdanau_ref(hidden, enc_output, w_fc, b_fc, v):
    """Pure-JAX reference applying the same bf16 rounding of enc/We as the kernel."""
    D = hidden.shape[1]
    wh = w_fc[:D, :]
    we = w_fc[D:, :].astype(jnp.bfloat16).astype(jnp.float32)
    enc = enc_output.astype(jnp.bfloat16).astype(jnp.float32)
    hproj = jnp.dot(hidden, wh, precision="highest") + b_fc[None, :]
    eproj = jnp.einsum("bse,ed->bsd", enc, we, precision="highest")
    energy = jnp.tanh(eproj + hproj[:, None, :])
    scores = jnp.einsum("bsd,d->bs", energy, v, precision="highest")
    return jax.nn.softmax(scores, axis=1)


if __name__ == "__main__":
    B = 2
    enc_hidden_dim = 16
    dec_hidden_dim = 32
    step = 8
    E2 = 2 * enc_hidden_dim
    cat_dim = E2 + dec_hidden_dim

    key = jax.random.PRNGKey(0)
    k_h, k_e, k_w, k_b, k_v = jax.random.split(key, 5)

    hidden = jax.random.normal(k_h, (B, dec_hidden_dim), dtype=jnp.float32)
    enc_output = jax.random.normal(k_e, (B, step, E2), dtype=jnp.float32)

    # Deterministic parameter init (shapes match nn.Linear(cat_dim, dec) + v param).
    w_fc = (jax.random.uniform(k_w, (cat_dim, dec_hidden_dim), dtype=jnp.float32)
            - 0.5) * (2.0 / jnp.sqrt(cat_dim))
    b_fc = (jax.random.uniform(k_b, (dec_hidden_dim,), dtype=jnp.float32)
            - 0.5) * (2.0 / jnp.sqrt(cat_dim))
    v = jax.random.uniform(k_v, (dec_hidden_dim,), dtype=jnp.float32)

    out = jax.block_until_ready(bahdanau_attention(hidden, enc_output, w_fc, b_fc, v))
    ref = bahdanau_ref(hidden, enc_output, w_fc, b_fc, v)

    assert out.shape == (B, step)
    assert jnp.allclose(jnp.sum(out, axis=1), 1.0, atol=2e-3), "rows do not sum to 1"
    assert jnp.allclose(out, ref, atol=2e-3, rtol=2e-3), "mismatch vs. pure-JAX reference"

    print("KERNEL_OK")
</pallas_src>

<mosaic_0001>
module attributes {stable_mosaic.version = 11 : i64} {
  func.func @bahdanau_kernel(%arg0: i32, %arg1: i32, %arg2: memref<2x128xf32, #tpu.memory_space<vmem>>, %arg3: memref<2x8x32xf32, #tpu.memory_space<vmem>>, %arg4: memref<32x128xbf16, #tpu.memory_space<vmem>>, %arg5: memref<1x128xf32, #tpu.memory_space<vmem>>, %arg6: memref<2x128xf32, #tpu.memory_space<vmem>>) attributes {dimension_semantics = [#tpu.dimension_semantics<parallel>, #tpu.dimension_semantics<arbitrary>], iteration_bounds = array<i64: 1, 1>, scalar_prefetch = 0 : i64, scratch_operands = 0 : i64, tpu.core_type = #tpu.core_type<tc>, window_params = [{transform_indices = @transform_0, window_bounds = array<i64: 2, 128>}, {transform_indices = @transform_1, window_bounds = array<i64: 2, 8, 32>}, {pipeline_mode = #tpu.pipeline_mode<synchronous>, transform_indices = @transform_2, window_bounds = array<i64: 32, 128>}, {pipeline_mode = #tpu.pipeline_mode<synchronous>, transform_indices = @transform_3, window_bounds = array<i64: 1, 128>}, {transform_indices = @transform_4, window_bounds = array<i64: 2, 128>}]} {
    %c0 = arith.constant 0 : index
    %c0_0 = arith.constant 0 : index
    %c0_1 = arith.constant 0 : index
    %0 = vector.load %arg3[%c0, %c0_0, %c0_1] : memref<2x8x32xf32, #tpu.memory_space<vmem>>, vector<2x8x32xf32>
    %1 = vector.shape_cast %0 : vector<2x8x32xf32> to vector<16x32xf32>
    %2 = arith.truncf %1 : vector<16x32xf32> to vector<16x32xbf16>
    %c0_2 = arith.constant 0 : index
    %c0_3 = arith.constant 0 : index
    %3 = vector.load %arg4[%c0_2, %c0_3] : memref<32x128xbf16, #tpu.memory_space<vmem>>, vector<32x128xbf16>
    %cst = arith.constant dense<0.000000e+00> : vector<16x128xf32>
    %4 = tpu.matmul %2, %3, %cst {dimension_numbers = #tpu.dot_dimension_numbers<[1], [0], [0], [1], [0, 0, 1, 1], [], []>} : vector<16x32xbf16>, vector<32x128xbf16>, vector<16x128xf32> -> vector<16x128xf32>
    %5 = vector.shape_cast %4 : vector<16x128xf32> to vector<2x8x128xf32>
    %c0_4 = arith.constant 0 : index
    %c0_5 = arith.constant 0 : index
    %6 = vector.load %arg2[%c0_4, %c0_5] : memref<2x128xf32, #tpu.memory_space<vmem>>, vector<2x128xf32>
    %7 = vector.shape_cast %6 : vector<2x128xf32> to vector<2x1x128xf32>
    %8 = vector.broadcast %7 : vector<2x1x128xf32> to vector<2x8x128xf32>
    %9 = arith.addf %5, %8 : vector<2x8x128xf32>
    %10 = math.tanh %9 : vector<2x8x128xf32>
    %c0_6 = arith.constant 0 : index
    %c0_7 = arith.constant 0 : index
    %11 = vector.load %arg5[%c0_6, %c0_7] : memref<1x128xf32, #tpu.memory_space<vmem>>, vector<1x128xf32>
    %12 = vector.shape_cast %11 : vector<1x128xf32> to vector<1x1x128xf32>
    %13 = vector.broadcast %12 : vector<1x1x128xf32> to vector<2x8x128xf32>
    %14 = arith.mulf %10, %13 : vector<2x8x128xf32>
    %cst_8 = arith.constant dense<0.000000e+00> : vector<2x8xf32>
    %15 = vector.multi_reduction <add>, %14, %cst_8 [2] : vector<2x8x128xf32> to vector<2x8xf32>
    %c0_9 = arith.constant 0 : index
    %c0_10 = arith.constant 0 : index
    %16 = vector.load %arg6[%c0_9, %c0_10] : memref<2x128xf32, #tpu.memory_space<vmem>>, vector<2x8xf32>
    tpu.vector_store %arg6[%c0_9, %c0_10], %15 {strides = array<i32>} : memref<2x128xf32, #tpu.memory_space<vmem>>, vector<2x8xf32>,
    %c0_i32 = arith.constant 0 : i32
    %17 = arith.cmpi eq, %arg1, %c0_i32 : i32
    %18 = arith.extui %17 : i1 to i32
    %c0_i32_11 = arith.constant 0 : i32
    %19 = arith.cmpi ne, %18, %c0_i32_11 : i32
    scf.if %19 {
      %c0_12 = arith.constant 0 : index
      %c0_13 = arith.constant 0 : index
      %20 = vector.load %arg6[%c0_12, %c0_13] : memref<2x128xf32, #tpu.memory_space<vmem>>, vector<2x128xf32>
      %21 = tpu.iota {dimensions = array<i32: 1>} : vector<2x128xi32>
      %c8_i32 = arith.constant 8 : i32
      %22 = vector.broadcast %c8_i32 : i32 to vector<2x128xi32>
      %23 = arith.cmpi slt, %21, %22 : vector<2x128xi32>
      %cst_14 = arith.constant 0xFF800000 : f32
      %24 = vector.broadcast %cst_14 : f32 to vector<2x128xf32>
      %25 = arith.select %23, %20, %24 : vector<2x128xi1>, vector<2x128xf32>
      %cst_15 = arith.constant dense<0xFF800000> : vector<2xf32>
      %26 = vector.multi_reduction <maximumf>, %25, %cst_15 [1] : vector<2x128xf32> to vector<2xf32>
      %27 = vector.shape_cast %26 : vector<2xf32> to vector<2x1xf32>
      %28 = vector.broadcast %27 : vector<2x1xf32> to vector<2x128xf32>
      %29 = arith.subf %25, %28 : vector<2x128xf32>
      %30 = math.exp %29 : vector<2x128xf32>
      %cst_16 = arith.constant dense<0.000000e+00> : vector<2xf32>
      %31 = vector.multi_reduction <add>, %30, %cst_16 [1] : vector<2x128xf32> to vector<2xf32>
      %32 = vector.shape_cast %31 : vector<2xf32> to vector<2x1xf32>
      %33 = tpu.reciprocal %32 {approx = true} : vector<2x1xf32> -> vector<2x1xf32>
      %34 = vector.broadcast %33 : vector<2x1xf32> to vector<2x128xf32>
      %35 = arith.mulf %30, %34 : vector<2x128xf32>
      %c0_17 = arith.constant 0 : index
      %c0_18 = arith.constant 0 : index
      %36 = vector.load %arg6[%c0_17, %c0_18] : memref<2x128xf32, #tpu.memory_space<vmem>>, vector<2x128xf32>
      tpu.vector_store %arg6[%c0_17, %c0_18], %35 {strides = array<i32>} : memref<2x128xf32, #tpu.memory_space<vmem>>, vector<2x128xf32>,
    } else {
    }
    return
  }
  func.func @transform_0(%arg0: i32, %arg1: i32) -> (i32, i32) {
    %c0_i32 = arith.constant 0 : i32
    %c0_i32_0 = arith.constant 0 : i32
    return %arg0, %c0_i32 : i32, i32
  }
  func.func @transform_1(%arg0: i32, %arg1: i32) -> (i32, i32, i32) {
    %c0_i32 = arith.constant 0 : i32
    %c0_i32_0 = arith.constant 0 : i32
    return %arg0, %arg1, %c0_i32 : i32, i32, i32
  }
  func.func @transform_2(%arg0: i32, %arg1: i32) -> (i32, i32) {
    %c0_i32 = arith.constant 0 : i32
    %c0_i32_0 = arith.constant 0 : i32
    %c0_i32_1 = arith.constant 0 : i32
    return %c0_i32, %c0_i32_0 : i32, i32
  }
  func.func @transform_3(%arg0: i32, %arg1: i32) -> (i32, i32) {
    %c0_i32 = arith.constant 0 : i32
    %c0_i32_0 = arith.constant 0 : i32
    %c0_i32_1 = arith.constant 0 : i32
    return %c0_i32, %c0_i32_0 : i32, i32
  }
  func.func @transform_4(%arg0: i32, %arg1: i32) -> (i32, i32) {
    %c0_i32 = arith.constant 0 : i32
    %c0_i32_0 = arith.constant 0 : i32
    return %arg0, %c0_i32 : i32, i32
  }
}

module attributes {stable_mosaic.version = 11 : i64} {
  func.func @bahdanau_kernel(%arg0: i32, %arg1: i32, %arg2: memref<2x128xf32, #tpu.memory_space<vmem>>, %arg3: memref<2x8x32xf32, #tpu.memory_space<vmem>>, %arg4: memref<32x128xbf16, #tpu.memory_space<vmem>>, %arg5: memref<1x128xf32, #tpu.memory_space<vmem>>, %arg6: memref<2x128xf32, #tpu.memory_space<vmem>>) attributes {dimension_semantics = [#tpu.dimension_semantics<parallel>, #tpu.dimension_semantics<arbitrary>], iteration_bounds = array<i64: 1, 1>, scalar_prefetch = 0 : i64, scratch_operands = 0 : i64, tpu.core_type = #tpu.core_type<tc>, window_params = [{transform_indices = @transform_0, window_bounds = array<i64: 2, 128>}, {transform_indices = @transform_1, window_bounds = array<i64: 2, 8, 32>}, {pipeline_mode = #tpu.pipeline_mode<synchronous>, transform_indices = @transform_2, window_bounds = array<i64: 32, 128>}, {pipeline_mode = #tpu.pipeline_mode<synchronous>, transform_indices = @transform_3, window_bounds = array<i64: 1, 128>}, {transform_indices = @transform_4, window_bounds = array<i64: 2, 128>}]} {
    %c0 = arith.constant 0 : index
    %c0_0 = arith.constant 0 : index
    %c0_1 = arith.constant 0 : index
    %0 = vector.load %arg3[%c0, %c0_0, %c0_1] : memref<2x8x32xf32, #tpu.memory_space<vmem>>, vector<2x8x32xf32>
    %1 = vector.shape_cast %0 : vector<2x8x32xf32> to vector<16x32xf32>
    %2 = arith.truncf %1 : vector<16x32xf32> to vector<16x32xbf16>
    %c0_2 = arith.constant 0 : index
    %c0_3 = arith.constant 0 : index
    %3 = vector.load %arg4[%c0_2, %c0_3] : memref<32x128xbf16, #tpu.memory_space<vmem>>, vector<32x128xbf16>
    %cst = arith.constant dense<0.000000e+00> : vector<16x128xf32>
    %4 = tpu.matmul %2, %3, %cst {dimension_numbers = #tpu.dot_dimension_numbers<[1], [0], [0], [1], [0, 0, 1, 1], [], []>} : vector<16x32xbf16>, vector<32x128xbf16>, vector<16x128xf32> -> vector<16x128xf32>
    %5 = vector.shape_cast %4 : vector<16x128xf32> to vector<2x8x128xf32>
    %c0_4 = arith.constant 0 : index
    %c0_5 = arith.constant 0 : index
    %6 = vector.load %arg2[%c0_4, %c0_5] : memref<2x128xf32, #tpu.memory_space<vmem>>, vector<2x128xf32>
    %7 = vector.shape_cast %6 : vector<2x128xf32> to vector<2x1x128xf32>
    %8 = vector.broadcast %7 : vector<2x1x128xf32> to vector<2x8x128xf32>
    %9 = arith.addf %5, %8 : vector<2x8x128xf32>
    %10 = math.tanh %9 : vector<2x8x128xf32>
    %c0_6 = arith.constant 0 : index
    %c0_7 = arith.constant 0 : index
    %11 = vector.load %arg5[%c0_6, %c0_7] : memref<1x128xf32, #tpu.memory_space<vmem>>, vector<1x128xf32>
    %12 = vector.shape_cast %11 : vector<1x128xf32> to vector<1x1x128xf32>
    %13 = vector.broadcast %12 : vector<1x1x128xf32> to vector<2x8x128xf32>
    %14 = arith.mulf %10, %13 : vector<2x8x128xf32>
    %cst_8 = arith.constant dense<0.000000e+00> : vector<2x8xf32>
    %15 = vector.multi_reduction <add>, %14, %cst_8 [2] : vector<2x8x128xf32> to vector<2x8xf32>
    %c0_9 = arith.constant 0 : index
    %c0_10 = arith.constant 0 : index
    %16 = vector.load %arg6[%c0_9, %c0_10] : memref<2x128xf32, #tpu.memory_space<vmem>>, vector<2x8xf32>
    tpu.vector_store %arg6[%c0_9, %c0_10], %15 {strides = array<i32>} : memref<2x128xf32, #tpu.memory_space<vmem>>, vector<2x8xf32>,
    %c0_i32 = arith.constant 0 : i32
    %17 = arith.cmpi eq, %arg1, %c0_i32 : i32
    %18 = arith.extui %17 : i1 to i32
    %c0_i32_11 = arith.constant 0 : i32
    %19 = arith.cmpi ne, %18, %c0_i32_11 : i32
    scf.if %19 {
      %c0_12 = arith.constant 0 : index
      %c0_13 = arith.constant 0 : index
      %20 = vector.load %arg6[%c0_12, %c0_13] : memref<2x128xf32, #tpu.memory_space<vmem>>, vector<2x128xf32>
      %21 = tpu.iota {dimensions = array<i32: 1>} : vector<2x128xi32>
      %c8_i32 = arith.constant 8 : i32
      %22 = vector.broadcast %c8_i32 : i32 to vector<2x128xi32>
      %23 = arith.cmpi slt, %21, %22 : vector<2x128xi32>
      %cst_14 = arith.constant 0xFF800000 : f32
      %24 = vector.broadcast %cst_14 : f32 to vector<2x128xf32>
      %25 = arith.select %23, %20, %24 : vector<2x128xi1>, vector<2x128xf32>
      %cst_15 = arith.constant dense<0xFF800000> : vector<2xf32>
      %26 = vector.multi_reduction <maximumf>, %25, %cst_15 [1] : vector<2x128xf32> to vector<2xf32>
      %27 = vector.shape_cast %26 : vector<2xf32> to vector<2x1xf32>
      %28 = vector.broadcast %27 : vector<2x1xf32> to vector<2x128xf32>
      %29 = arith.subf %25, %28 : vector<2x128xf32>
      %30 = math.exp %29 : vector<2x128xf32>
      %cst_16 = arith.constant dense<0.000000e+00> : vector<2xf32>
      %31 = vector.multi_reduction <add>, %30, %cst_16 [1] : vector<2x128xf32> to vector<2xf32>
      %32 = vector.shape_cast %31 : vector<2xf32> to vector<2x1xf32>
      %33 = tpu.reciprocal %32 {approx = true} : vector<2x1xf32> -> vector<2x1xf32>
      %34 = vector.broadcast %33 : vector<2x1xf32> to vector<2x128xf32>
      %35 = arith.mulf %30, %34 : vector<2x128xf32>
      %c0_17 = arith.constant 0 : index
      %c0_18 = arith.constant 0 : index
      %36 = vector.load %arg6[%c0_17, %c0_18] : memref<2x128xf32, #tpu.memory_space<vmem>>, vector<2x128xf32>
      tpu.vector_store %arg6[%c0_17, %c0_18], %35 {strides = array<i32>} : memref<2x128xf32, #tpu.memory_space<vmem>>, vector<2x128xf32>,
    } else {
    }
    return
  }
  func.func @transform_0(%arg0: i32, %arg1: i32) -> (i32, i32) {
    %c0_i32 = arith.constant 0 : i32
    %c0_i32_0 = arith.constant 0 : i32
    return %arg0, %c0_i32 : i32, i32
  }
  func.func @transform_1(%arg0: i32, %arg1: i32) -> (i32, i32, i32) {
    %c0_i32 = arith.constant 0 : i32
    %c0_i32_0 = arith.constant 0 : i32
    return %arg0, %arg1, %c0_i32 : i32, i32, i32
  }
  func.func @transform_2(%arg0: i32, %arg1: i32) -> (i32, i32) {
    %c0_i32 = arith.constant 0 : i32
    %c0_i32_0 = arith.constant 0 : i32
    %c0_i32_1 = arith.constant 0 : i32
    return %c0_i32, %c0_i32_0 : i32, i32
  }
  func.func @transform_3(%arg0: i32, %arg1: i32) -> (i32, i32) {
    %c0_i32 = arith.constant 0 : i32
    %c0_i32_0 = arith.constant 0 : i32
    %c0_i32_1 = arith.constant 0 : i32
    return %c0_i32, %c0_i32_0 : i32, i32
  }
  func.func @transform_4(%arg0: i32, %arg1: i32) -> (i32, i32) {
    %c0_i32 = arith.constant 0 : i32
    %c0_i32_0 = arith.constant 0 : i32
    return %arg0, %c0_i32 : i32, i32
  }
}

</mosaic_0001>

<llo_original>
// kernel: tpu_custom_call.1
$region0: #{tpu_custom_call.1}
  #allocation0 [shape = 'u32[]', space=smem, size = 0x4, offset = 0x4, fixed_abs, tag = 'smem constant byte address 0x4 - core index']
  #allocation1 [shape = 'u32[144,128]{1,0:T(1,128)}', space=vmem, size = 0x12000, scoped, tag = 'internal scratch']
  %s0 = inlined_call_operand.hbm [shape: f32[2,128], index: 0, kind: input, shape index: {}]
  %s1 = inlined_call_operand.hbm [shape: f32[2,8,32], index: 1, kind: input, shape index: {}]
  %s2 = inlined_call_operand.hbm [shape: bf16[32,128], index: 2, kind: input, shape index: {}]
  %s3 = inlined_call_operand.vmem [shape: f32[1,128], index: 3, kind: input, shape index: {}]
  %s4 = inlined_call_operand.hbm [shape: f32[2,128], index: 4, kind: output, shape index: {}]
  %s5 = sld [smem:[#allocation0]]
  $region42: #{tpu_custom_call.1} parent=0
    _
  %s7 = ssub.s32 1, %s5
  %s8 = scalar_select 0, %s7, %s5
  $region1: #{tpu_custom_call.1} parent=0
    #allocation2 [shape = 'u8[1024]{0}', space=vmem, size = 0x400, scoped, tag = 'input window, operand 0, single buffered']
    #allocation3 [shape = 's32[1]{0}', space=sflag, size = 0x4, scoped, tag = 'scoped memory for tpu_custom_call.1']
    #allocation4 [shape = 's32[1]{0}', space=sflag, size = 0x4, scoped, tag = 'scoped memory for tpu_custom_call.1']
    #allocation5 [shape = 'u8[8192]{0}', space=vmem, size = 0x2000, scoped, tag = 'input window, operand 1, single buffered']
    #allocation6 [shape = 's32[1]{0}', space=sflag, size = 0x4, scoped, tag = 'scoped memory for tpu_custom_call.1']
    #allocation7 [shape = 'u8[8192]{0}', space=vmem, size = 0x2000, scoped, tag = 'input window, operand 2, single buffered']
    #allocation8 [shape = 'u8[1024]{0}', space=vmem, size = 0x400, scoped, tag = 'output window, operand 0, single buffered']
    %9 = vsyncpa [#allocation3], 0
    %10 = vsyncpa [#allocation6], 0
    %11 = vsyncpa [#allocation4], 0
    // Predicated region
    $region2: #{tpu_custom_call.1} parent=1 // pred_check
      _
    $region3: #{tpu_custom_call.1} parent=1 // pred_check_branch
      %13 = sbr.rel (0) target = $region5
    $region4: #{tpu_custom_call.1} parent=1 // pred_region
      %s15 = ssub.s32 32, 32
      %16 = vsyncadd [#allocation3], %s15
      %s18 = sshll.u32 [#allocation2], 4
      %s19 = int_to_ptr.vmem [resolvable:$true] %s18
      %21 = dma.hbm_to_vmem [thread:$0]  %s0, 32, %s19, [#allocation3]
    $region5: #{tpu_custom_call.1} parent=1 // pred_fallthru
      _
    // Predicated region
    $region6: #{tpu_custom_call.1} parent=1 // pred_check
      _
    $region7: #{tpu_custom_call.1} parent=1 // pred_check_branch
      %23 = sbr.rel (0) target = $region9
    $region8: #{tpu_custom_call.1} parent=1 // pred_region
      %s25 = ssub.s32 256, 256
      %26 = vsyncadd [#allocation6], %s25
      %s27 = sshll.u32 [#allocation5], 4
      %s28 = int_to_ptr.vmem [resolvable:$true] %s27
      %33 = dma.hbm_to_vmem [thread:$0]  %s1, 256, %s28, [#allocation6], 128, 128, 8
    $region9: #{tpu_custom_call.1} parent=1 // pred_fallthru
      _
    // Predicated region
    $region10: #{tpu_custom_call.1} parent=1 // pred_check
      _
    $region11: #{tpu_custom_call.1} parent=1 // pred_check_branch
      %35 = sbr.rel (0) target = $region13
    $region12: #{tpu_custom_call.1} parent=1 // pred_region
      %s37 = ssub.s32 256, 256
      %38 = vsyncadd [#allocation6], %s37
      %s39 = sshll.u32 [#allocation7], 4
      %s40 = int_to_ptr.vmem [resolvable:$true] %s39
      %45 = dma.hbm_to_vmem [thread:$0]  %s2, 256, %s40, [#allocation6], 64, 64, 4
    $region13: #{tpu_custom_call.1} parent=1 // pred_fallthru
      _
    // Predicated region
    $region14: #{tpu_custom_call.1} parent=1 // pred_check
      _
    $region15: #{tpu_custom_call.1} parent=1 // pred_check_branch
      %47 = sbr.rel (0) target = $region17
    $region16: #{tpu_custom_call.1} parent=1 // pred_region
      _
    $region17: #{tpu_custom_call.1} parent=1 // pred_fallthru
      _
    // Predicated region
    $region18: #{tpu_custom_call.1} parent=1 // pred_check
      _
    $region19: #{tpu_custom_call.1} parent=1 // pred_check_branch
      %49 = sbr.rel (0) target = $region21
    $region20: #{tpu_custom_call.1} parent=1 // pred_region
      %50 = dma.done [#allocation3], 32
    $region21: #{tpu_custom_call.1} parent=1 // pred_fallthru
      _
    // Predicated region
    $region22: #{tpu_custom_call.1} parent=1 // pred_check
      _
    $region23: #{tpu_custom_call.1} parent=1 // pred_check_branch
      %52 = sbr.rel (0) target = $region25
    $region24: #{tpu_custom_call.1} parent=1 // pred_region
      %53 = dma.done [#allocation6], 256
    $region25: #{tpu_custom_call.1} parent=1 // pred_fallthru
      _
    // Predicated region
    $region26: #{tpu_custom_call.1} parent=1 // pred_check
      _
    $region27: #{tpu_custom_call.1} parent=1 // pred_check_branch
      %55 = sbr.rel (0) target = $region29
    $region28: #{tpu_custom_call.1} parent=1 // pred_region
      %56 = dma.done [#allocation6], 256
    $region29: #{tpu_custom_call.1} parent=1 // pred_fallthru
      _
    %v58 = vld [vmem:[#allocation5] sm:$0xff]
    %v59 = vld [vmem:[#allocation5 + $0x8] sm:$0xff]
    %v60 = vpack.c.bf16 %v59, %v58
    %v61 = vld [vmem:[#allocation7] sm:$0xf]
    %v62 = vld [vmem:[#allocation7 + $0x4] sm:$0xf]
    %v63 = vld [vmem:[#allocation7 + $0x8] sm:$0xf]
    %v64 = vld [vmem:[#allocation7 + $0xc] sm:$0xf]
    %v69 = vunpack.c.l.b16 %v61
    %v70 = vunpack.c.l.b16 %v62
    %v71 = vunpack.c.l.b16 %v63
    %v72 = vunpack.c.l.b16 %v64
    %v73 = vpack.c.b16 %v70, %v69
    %v74 = vpack.c.b16 %v72, %v71
    %vm77 = vcmask 261120
    %v79 = vsel %vm77, %v60, 0
    %81 = vmatprep.subr.bf16.mxu0 0
    %82 = vmatpush1.bf16.msra.mxu0 %v73
    %83 = vmatprep.subr.bf16.mxu0 0
    %84 = vmatpush1.bf16.msra.mxu0 %v74
    %85 = vmatprep.subr.bf16.mxu0 0
    %86 = vmatpush1.bf16.msra.mxu0 0
    %87 = vmatprep.subr.bf16.mxu0 0
    %88 = vmatpush1.bf16.msra.mxu0 0
    %89 = vmatprep.subr.bf16.mxu0 0
    %90 = vmatpush1.bf16.msra.mxu0 0
    %91 = vmatprep.subr.bf16.mxu0 0
    %92 = vmatpush1.bf16.msra.mxu0 0
    %93 = vmatprep.subr.bf16.mxu0 0
    %94 = vmatpush1.bf16.msra.mxu0 0
    %95 = vmatprep.subr.bf16.mxu0 0
    %96 = vmatpush1.bf16.msra.mxu0 0
    %97 = vmatprep.subr.bf16.mxu0 0
    %98 = vmatpush1.bf16.msra.mxu0 0
    %99 = vmatprep.subr.bf16.mxu0 0
    %100 = vmatpush1.bf16.msra.mxu0 0
    %101 = vmatprep.subr.bf16.mxu0 0
    %102 = vmatpush1.bf16.msra.mxu0 0
    %103 = vmatprep.subr.bf16.mxu0 0
    %104 = vmatpush1.bf16.msra.mxu0 0
    %105 = vmatprep.subr.bf16.mxu0 0
    %106 = vmatpush1.bf16.msra.mxu0 0
    %107 = vmatprep.subr.bf16.mxu0 0
    %108 = vmatpush1.bf16.msra.mxu0 0
    %109 = vmatprep.subr.bf16.mxu0 0
    %110 = vmatpush1.bf16.msra.mxu0 0
    %111 = vmatprep.subr.bf16.mxu0 0
    %112 = vmatpush1.bf16.msra.mxu0 0
    %113 = vmatprep.mubr.bf16.mxu0 0
    %114 = vmatmul.mubr.bf16.gmra.mrb[0].mxu0 %v79
    %v115 = vpop.f32.mrb[0].mxu0
    %v116 = vadd.f32 0.0, %v115
    %v117 = vpop.f32.mrb[0].mxu0
    %v118 = vpop.f32.mrb[0].mxu0
    %v119 = vadd.f32 0.0, %v118
    %v120 = vpop.f32.mrb[0].mxu0
    %121 = vdwg.mxu0
    %v122 = vld [vmem:[#allocation2] sm:$0x3]
    %v125 = vunpack.c.l.s4 1966171168
    %v126 = vunpack.c.0.s8 %v125
    %v127 = vlaneseq
    %v128 = vshrl.u32 %v127, 7
    %v129 = vsub.s32 %v126, %v128
    %v130 = vrot.slane %v122, %v129
    %v131 = vcombine.high %v130, %v130
    %v133 = vunpack.c.l.s4 1966171168
    %v134 = vunpack.c.0.s8 %v133
    %v135 = vlaneseq
    %v136 = vshrl.u32 %v135, 7
    %v137 = vsub.s32 %v134, %v136
    %v138 = vrot.slane %v130, %v137
    %v140 = vunpack.c.l.s4 1966171168
    %v141 = vunpack.c.0.s8 %v140
    %v142 = vlaneseq
    %v143 = vshrl.u32 %v142, 7
    %v144 = vsub.s32 %v141, %v143
    %v145 = vrot.slane %v131, %v144
    %v146 = vlaneseq
    %v147 = vshrl.u32 %v146, 7
    %v148 = vsub.s32 0, %v147
    %v149 = vrot.slane %v138, %v148
    %v150 = vlaneseq
    %v151 = vshrl.u32 %v150, 7
    %v152 = vsub.s32 0, %v151
    %v153 = vrot.slane %v145, %v152
    %v156 = vadd.f32 %v116, %v149
    %v157 = vadd.f32 %v119, %v153
    %v158 = vtanh.pop %v156
    %v159 = vtanh.pop %v157
    %v160 = vld [vmem:[%s3] sm:$0x1]
    %v162 = vlaneseq
    %v163 = vshrl.u32 %v162, 7
    %v164 = vsub.s32 0, %v163
    %v165 = vrot.slane %v160, %v164
    %v167 = vmul.f32 %v158, %v165
    %v168 = vmul.f32 %v159, %v165
    %169 = vadd.xlane.f32.xlu0 %v167
    %v170 = vpop.xlane.xlu0 %169
    %171 = vadd.xlane.f32.xlu0 %v168
    %v172 = vpop.xlane.xlu0 %171
    %v175 = vlaneseq
    %v176 = vand.u32 %v175, 127
    %v177 = vlaneseq
    %v178 = vshrl.u32 %v177, 7
    %v179 = vsub.s32 %v176, %v178
    %v180 = vrot.slane %v170, %v179
    %v181 = vlaneseq
    %v182 = vshrl.u32 %v181, 7
    %v183 = vsub.s32 %v176, %v182
    %v184 = vrot.slane %v172, %v183
    %vm185 = vcmask 1041409
    %v186 = vsel %vm185, %v184, %v180
    %vm188 = vcmask 58368
    %189 = vst.msk [vmem:[#allocation8] sm:$0x3] %vm188, %v186
    %p190 = scmp.eq.s32.totalorder 0, 0
    // Predicated region
    $region30: #{tpu_custom_call.1} parent=1 // pred_check
      %p191 = pneg %p190
    $region31: #{tpu_custom_call.1} parent=1 // pred_check_branch
      %193 = sbr.rel (%p191) target = $region33
    $region32: #{tpu_custom_call.1} parent=1 // pred_region
      %v194 = vld [vmem:[#allocation8] sm:$0x3]
      %vm195 = vcmp.lt.s32.totalorder %v176, 8
      %v196 = vsel %vm195, %v194, -inf
      %vm197 = vcmask 1041408
      %v198 = vsel %vm197, %v196, -inf
      %199 = vmax.xlane.f32.xlu0 %v198
      %v200 = vpop.xlane.xlu0 %199
      %v201 = vsub.f32 %v196, %v200
      %v202 = vmul.f32 %v201, 1.442695
      %v203 = vpow.pop %v202
      %v204 = vsel %vm197, %v203, 0.0
      %205 = vadd.xlane.f32.xlu0 %v204
      %v206 = vpop.xlane.xlu0 %205
      %v207 = vrcp.pop %v206
      %v208 = vmul.f32 %v203, %v207
      %209 = vst [vmem:[#allocation8] sm:$0x3] %v208
    $region33: #{tpu_custom_call.1} parent=1 // pred_fallthru
      _
    // Predicated region
    $region34: #{tpu_custom_call.1} parent=1 // pred_check
      _
    $region35: #{tpu_custom_call.1} parent=1 // pred_check_branch
      %211 = sbr.rel (0) target = $region37
    $region36: #{tpu_custom_call.1} parent=1 // pred_region
      %s213 = ssub.s32 32, 32
      %214 = vsyncadd [#allocation4], %s213
      %s216 = sshll.u32 [#allocation8], 4
      %s217 = int_to_ptr.vmem [resolvable:$true] %s216
      %219 = dma.vmem_to_hbm [thread:$0]  %s217, 32, %s4, [#allocation4]
    $region37: #{tpu_custom_call.1} parent=1 // pred_fallthru
      _
    // Predicated region
    $region38: #{tpu_custom_call.1} parent=1 // pred_check
      _
    $region39: #{tpu_custom_call.1} parent=1 // pred_check_branch
      %221 = sbr.rel (0) target = $region41
    $region40: #{tpu_custom_call.1} parent=1 // pred_region
      %222 = dma.done [#allocation4], 32
    $region41: #{tpu_custom_call.1} parent=1 // pred_fallthru
      _
    %223 = vsyncpa [#allocation3], 1
    %224 = vsyncpa [#allocation6], 1
    %225 = vsyncpa [#allocation4], 1

// kernel: tpu_custom_call.1
$region0: #{tpu_custom_call.1}
  #allocation0 [shape = 'u32[]', space=smem, size = 0x4, offset = 0x4, fixed_abs, tag = 'smem constant byte address 0x4 - core index']
  #allocation1 [shape = 'u32[144,128]{1,0:T(1,128)}', space=vmem, size = 0x12000, scoped, tag = 'internal scratch']
  %s0 = inlined_call_operand.hbm [shape: f32[2,128], index: 0, kind: input, shape index: {}]
  %s1 = inlined_call_operand.hbm [shape: f32[2,8,32], index: 1, kind: input, shape index: {}]
  %s2 = inlined_call_operand.hbm [shape: bf16[32,128], index: 2, kind: input, shape index: {}]
  %s3 = inlined_call_operand.vmem [shape: f32[1,128], index: 3, kind: input, shape index: {}]
  %s4 = inlined_call_operand.hbm [shape: f32[2,128], index: 4, kind: output, shape index: {}]
  %s5 = sld [smem:[#allocation0]]
  $region42: #{tpu_custom_call.1} parent=0
    _
  %s7 = ssub.s32 1, %s5
  %s8 = scalar_select 0, %s7, %s5
  $region1: #{tpu_custom_call.1} parent=0
    #allocation2 [shape = 'u8[1024]{0}', space=vmem, size = 0x400, scoped, tag = 'input window, operand 0, single buffered']
    #allocation3 [shape = 's32[1]{0}', space=sflag, size = 0x4, scoped, tag = 'scoped memory for tpu_custom_call.1']
    #allocation4 [shape = 's32[1]{0}', space=sflag, size = 0x4, scoped, tag = 'scoped memory for tpu_custom_call.1']
    #allocation5 [shape = 'u8[8192]{0}', space=vmem, size = 0x2000, scoped, tag = 'input window, operand 1, single buffered']
    #allocation6 [shape = 's32[1]{0}', space=sflag, size = 0x4, scoped, tag = 'scoped memory for tpu_custom_call.1']
    #allocation7 [shape = 'u8[8192]{0}', space=vmem, size = 0x2000, scoped, tag = 'input window, operand 2, single buffered']
    #allocation8 [shape = 'u8[1024]{0}', space=vmem, size = 0x400, scoped, tag = 'output window, operand 0, single buffered']
    %9 = vsyncpa [#allocation3], 0
    %10 = vsyncpa [#allocation6], 0
    %11 = vsyncpa [#allocation4], 0
    // Predicated region
    $region2: #{tpu_custom_call.1} parent=1 // pred_check
      _
    $region3: #{tpu_custom_call.1} parent=1 // pred_check_branch
      %13 = sbr.rel (0) target = $region5
    $region4: #{tpu_custom_call.1} parent=1 // pred_region
      %s15 = ssub.s32 32, 32
      %16 = vsyncadd [#allocation3], %s15
      %s18 = sshll.u32 [#allocation2], 4
      %s19 = int_to_ptr.vmem [resolvable:$true] %s18
      %21 = dma.hbm_to_vmem [thread:$0]  %s0, 32, %s19, [#allocation3]
    $region5: #{tpu_custom_call.1} parent=1 // pred_fallthru
      _
    // Predicated region
    $region6: #{tpu_custom_call.1} parent=1 // pred_check
      _
    $region7: #{tpu_custom_call.1} parent=1 // pred_check_branch
      %23 = sbr.rel (0) target = $region9
    $region8: #{tpu_custom_call.1} parent=1 // pred_region
      %s25 = ssub.s32 256, 256
      %26 = vsyncadd [#allocation6], %s25
      %s27 = sshll.u32 [#allocation5], 4
      %s28 = int_to_ptr.vmem [resolvable:$true] %s27
      %33 = dma.hbm_to_vmem [thread:$0]  %s1, 256, %s28, [#allocation6], 128, 128, 8
    $region9: #{tpu_custom_call.1} parent=1 // pred_fallthru
      _
    // Predicated region
    $region10: #{tpu_custom_call.1} parent=1 // pred_check
      _
    $region11: #{tpu_custom_call.1} parent=1 // pred_check_branch
      %35 = sbr.rel (0) target = $region13
    $region12: #{tpu_custom_call.1} parent=1 // pred_region
      %s37 = ssub.s32 256, 256
      %38 = vsyncadd [#allocation6], %s37
      %s39 = sshll.u32 [#allocation7], 4
      %s40 = int_to_ptr.vmem [resolvable:$true] %s39
      %45 = dma.hbm_to_vmem [thread:$0]  %s2, 256, %s40, [#allocation6], 64, 64, 4
    $region13: #{tpu_custom_call.1} parent=1 // pred_fallthru
      _
    // Predicated region
    $region14: #{tpu_custom_call.1} parent=1 // pred_check
      _
    $region15: #{tpu_custom_call.1} parent=1 // pred_check_branch
      %47 = sbr.rel (0) target = $region17
    $region16: #{tpu_custom_call.1} parent=1 // pred_region
      _
    $region17: #{tpu_custom_call.1} parent=1 // pred_fallthru
      _
    // Predicated region
    $region18: #{tpu_custom_call.1} parent=1 // pred_check
      _
    $region19: #{tpu_custom_call.1} parent=1 // pred_check_branch
      %49 = sbr.rel (0) target = $region21
    $region20: #{tpu_custom_call.1} parent=1 // pred_region
      %50 = dma.done [#allocation3], 32
    $region21: #{tpu_custom_call.1} parent=1 // pred_fallthru
      _
    // Predicated region
    $region22: #{tpu_custom_call.1} parent=1 // pred_check
      _
    $region23: #{tpu_custom_call.1} parent=1 // pred_check_branch
      %52 = sbr.rel (0) target = $region25
    $region24: #{tpu_custom_call.1} parent=1 // pred_region
      %53 = dma.done [#allocation6], 256
    $region25: #{tpu_custom_call.1} parent=1 // pred_fallthru
      _
    // Predicated region
    $region26: #{tpu_custom_call.1} parent=1 // pred_check
      _
    $region27: #{tpu_custom_call.1} parent=1 // pred_check_branch
      %55 = sbr.rel (0) target = $region29
    $region28: #{tpu_custom_call.1} parent=1 // pred_region
      %56 = dma.done [#allocation6], 256
    $region29: #{tpu_custom_call.1} parent=1 // pred_fallthru
      _
    %v58 = vld [vmem:[#allocation5] sm:$0xff]
    %v59 = vld [vmem:[#allocation5 + $0x8] sm:$0xff]
    %v60 = vpack.c.bf16 %v59, %v58
    %v61 = vld [vmem:[#allocation7] sm:$0xf]
    %v62 = vld [vmem:[#allocation7 + $0x4] sm:$0xf]
    %v63 = vld [vmem:[#allocation7 + $0x8] sm:$0xf]
    %v64 = vld [vmem:[#allocation7 + $0xc] sm:$0xf]
    %v69 = vunpack.c.l.b16 %v61
    %v70 = vunpack.c.l.b16 %v62
    %v71 = vunpack.c.l.b16 %v63
    %v72 = vunpack.c.l.b16 %v64
    %v73 = vpack.c.b16 %v70, %v69
    %v74 = vpack.c.b16 %v72, %v71
    %vm77 = vcmask 261120
    %v79 = vsel %vm77, %v60, 0
    %81 = vmatprep.subr.bf16.mxu0 0
    %82 = vmatpush1.bf16.msra.mxu0 %v73
    %83 = vmatprep.subr.bf16.mxu0 0
    %84 = vmatpush1.bf16.msra.mxu0 %v74
    %85 = vmatprep.subr.bf16.mxu0 0
    %86 = vmatpush1.bf16.msra.mxu0 0
    %87 = vmatprep.subr.bf16.mxu0 0
    %88 = vmatpush1.bf16.msra.mxu0 0
    %89 = vmatprep.subr.bf16.mxu0 0
    %90 = vmatpush1.bf16.msra.mxu0 0
    %91 = vmatprep.subr.bf16.mxu0 0
    %92 = vmatpush1.bf16.msra.mxu0 0
    %93 = vmatprep.subr.bf16.mxu0 0
    %94 = vmatpush1.bf16.msra.mxu0 0
    %95 = vmatprep.subr.bf16.mxu0 0
    %96 = vmatpush1.bf16.msra.mxu0 0
    %97 = vmatprep.subr.bf16.mxu0 0
    %98 = vmatpush1.bf16.msra.mxu0 0
    %99 = vmatprep.subr.bf16.mxu0 0
    %100 = vmatpush1.bf16.msra.mxu0 0
    %101 = vmatprep.subr.bf16.mxu0 0
    %102 = vmatpush1.bf16.msra.mxu0 0
    %103 = vmatprep.subr.bf16.mxu0 0
    %104 = vmatpush1.bf16.msra.mxu0 0
    %105 = vmatprep.subr.bf16.mxu0 0
    %106 = vmatpush1.bf16.msra.mxu0 0
    %107 = vmatprep.subr.bf16.mxu0 0
    %108 = vmatpush1.bf16.msra.mxu0 0
    %109 = vmatprep.subr.bf16.mxu0 0
    %110 = vmatpush1.bf16.msra.mxu0 0
    %111 = vmatprep.subr.bf16.mxu0 0
    %112 = vmatpush1.bf16.msra.mxu0 0
    %113 = vmatprep.mubr.bf16.mxu0 0
    %114 = vmatmul.mubr.bf16.gmra.mrb[0].mxu0 %v79
    %v115 = vpop.f32.mrb[0].mxu0
    %v116 = vadd.f32 0.0, %v115
    %v117 = vpop.f32.mrb[0].mxu0
    %v118 = vpop.f32.mrb[0].mxu0
    %v119 = vadd.f32 0.0, %v118
    %v120 = vpop.f32.mrb[0].mxu0
    %121 = vdwg.mxu0
    %v122 = vld [vmem:[#allocation2] sm:$0x3]
    %v125 = vunpack.c.l.s4 1966171168
    %v126 = vunpack.c.0.s8 %v125
    %v127 = vlaneseq
    %v128 = vshrl.u32 %v127, 7
    %v129 = vsub.s32 %v126, %v128
    %v130 = vrot.slane %v122, %v129
    %v131 = vcombine.high %v130, %v130
    %v133 = vunpack.c.l.s4 1966171168
    %v134 = vunpack.c.0.s8 %v133
    %v135 = vlaneseq
    %v136 = vshrl.u32 %v135, 7
    %v137 = vsub.s32 %v134, %v136
    %v138 = vrot.slane %v130, %v137
    %v140 = vunpack.c.l.s4 1966171168
    %v141 = vunpack.c.0.s8 %v140
    %v142 = vlaneseq
    %v143 = vshrl.u32 %v142, 7
    %v144 = vsub.s32 %v141, %v143
    %v145 = vrot.slane %v131, %v144
    %v146 = vlaneseq
    %v147 = vshrl.u32 %v146, 7
    %v148 = vsub.s32 0, %v147
    %v149 = vrot.slane %v138, %v148
    %v150 = vlaneseq
    %v151 = vshrl.u32 %v150, 7
    %v152 = vsub.s32 0, %v151
    %v153 = vrot.slane %v145, %v152
    %v156 = vadd.f32 %v116, %v149
    %v157 = vadd.f32 %v119, %v153
    %v158 = vtanh.pop %v156
    %v159 = vtanh.pop %v157
    %v160 = vld [vmem:[%s3] sm:$0x1]
    %v162 = vlaneseq
    %v163 = vshrl.u32 %v162, 7
    %v164 = vsub.s32 0, %v163
    %v165 = vrot.slane %v160, %v164
    %v167 = vmul.f32 %v158, %v165
    %v168 = vmul.f32 %v159, %v165
    %169 = vadd.xlane.f32.xlu0 %v167
    %v170 = vpop.xlane.xlu0 %169
    %171 = vadd.xlane.f32.xlu0 %v168
    %v172 = vpop.xlane.xlu0 %171
    %v175 = vlaneseq
    %v176 = vand.u32 %v175, 127
    %v177 = vlaneseq
    %v178 = vshrl.u32 %v177, 7
    %v179 = vsub.s32 %v176, %v178
    %v180 = vrot.slane %v170, %v179
    %v181 = vlaneseq
    %v182 = vshrl.u32 %v181, 7
    %v183 = vsub.s32 %v176, %v182
    %v184 = vrot.slane %v172, %v183
    %vm185 = vcmask 1041409
    %v186 = vsel %vm185, %v184, %v180
    %vm188 = vcmask 58368
    %189 = vst.msk [vmem:[#allocation8] sm:$0x3] %vm188, %v186
    %p190 = scmp.eq.s32.totalorder 0, 0
    // Predicated region
    $region30: #{tpu_custom_call.1} parent=1 // pred_check
      %p191 = pneg %p190
    $region31: #{tpu_custom_call.1} parent=1 // pred_check_branch
      %193 = sbr.rel (%p191) target = $region33
    $region32: #{tpu_custom_call.1} parent=1 // pred_region
      %v194 = vld [vmem:[#allocation8] sm:$0x3]
      %vm195 = vcmp.lt.s32.totalorder %v176, 8
      %v196 = vsel %vm195, %v194, -inf
      %vm197 = vcmask 1041408
      %v198 = vsel %vm197, %v196, -inf
      %199 = vmax.xlane.f32.xlu0 %v198
      %v200 = vpop.xlane.xlu0 %199
      %v201 = vsub.f32 %v196, %v200
      %v202 = vmul.f32 %v201, 1.442695
      %v203 = vpow.pop %v202
      %v204 = vsel %vm197, %v203, 0.0
      %205 = vadd.xlane.f32.xlu0 %v204
      %v206 = vpop.xlane.xlu0 %205
      %v207 = vrcp.pop %v206
      %v208 = vmul.f32 %v203, %v207
      %209 = vst [vmem:[#allocation8] sm:$0x3] %v208
    $region33: #{tpu_custom_call.1} parent=1 // pred_fallthru
      _
    // Predicated region
    $region34: #{tpu_custom_call.1} parent=1 // pred_check
      _
    $region35: #{tpu_custom_call.1} parent=1 // pred_check_branch
      %211 = sbr.rel (0) target = $region37
    $region36: #{tpu_custom_call.1} parent=1 // pred_region
      %s213 = ssub.s32 32, 32
      %214 = vsyncadd [#allocation4], %s213
      %s216 = sshll.u32 [#allocation8], 4
      %s217 = int_to_ptr.vmem [resolvable:$true] %s216
      %219 = dma.vmem_to_hbm [thread:$0]  %s217, 32, %s4, [#allocation4]
    $region37: #{tpu_custom_call.1} parent=1 // pred_fallthru
      _
    // Predicated region
    $region38: #{tpu_custom_call.1} parent=1 // pred_check
      _
    $region39: #{tpu_custom_call.1} parent=1 // pred_check_branch
      %221 = sbr.rel (0) target = $region41
    $region40: #{tpu_custom_call.1} parent=1 // pred_region
      %222 = dma.done [#allocation4], 32
    $region41: #{tpu_custom_call.1} parent=1 // pred_fallthru
      _
    %223 = vsyncpa [#allocation3], 1
    %224 = vsyncpa [#allocation6], 1
    %225 = vsyncpa [#allocation4], 1

</llo_original>
